<compile_context>
chip_gen: v7x
topology: tpu7x:2x2x1
jax: 0.10.0
libtpu: 0.0.40
codegen_flags: <defaults>
</compile_context>

<pallas_src>
import functools

import jax
import jax.numpy as jnp
from jax import lax
from jax.experimental import pallas as pl
from jax.experimental.pallas import tpu as pltpu

_EPS = 1e-8  # matches F.cosine_similarity's norm clamp


def _round_up(x, m):
    return ((x + m - 1) // m) * m


def _contrastive_kernel(fc_ref, txt_ref, lab_ref, out_ref, acc_ref, *,
                        margin, batch_size, tile_m, tile_n, mask_rows, mask_cols):
    i = pl.program_id(0)
    j = pl.program_id(1)

    @pl.when(j == 0)
    def _():
        acc_ref[...] = jnp.zeros_like(acc_ref)

    fc = fc_ref[...]                              # (2*tile_m, D)  fc0 block on top, fc1 below
    txt = txt_ref[...]                            # (tile_n, D)
    lab = lab_ref[...].astype(jnp.float32)        # (tile_m, tile_n)

    eps2 = _EPS * _EPS

    # Normalize the (small) textual block with rsqrt in its natural (tile_n, 1)
    # orientation, cast back to the input dtype so the MXU stays in bf16 for bf16 in.
    txt32 = txt.astype(jnp.float32)
    inv_t = lax.rsqrt(jnp.maximum(jnp.sum(txt32 * txt32, axis=-1, keepdims=True), eps2))
    txtn = (txt32 * inv_t).astype(fc.dtype)

    # One fused matmul for both fc_feats_0 and fc_feats_1 (contract last dims, no
    # transpose), f32 accumulation.
    dn = (((1,), (1,)), ((), ()))
    raw = lax.dot_general(fc, txtn, dn, preferred_element_type=jnp.float32)  # (2tm, tn)

    # Post-scale the fc side by per-row inverse norms (rsqrt, no divides, no
    # normalized f32 copy of the big operand).
    fc32 = fc.astype(jnp.float32)
    inv_f = lax.rsqrt(jnp.maximum(jnp.sum(fc32 * fc32, axis=-1, keepdims=True), eps2))
    cos = raw * inv_f                                                        # (2tm, tn)

    cos0 = cos[:tile_m, :]
    cos1 = cos[tile_m:, :]

    def pair_loss(c):
        return lab * (1.0 - c) + (1.0 - lab) * jnp.maximum(c - margin, 0.0)

    loss = pair_loss(cos0) + pair_loss(cos1)                                 # (tm, tn)

    # Masks only when padding exists (static Python flags -> no cost otherwise).
    if mask_rows:
        row = i * tile_m + lax.broadcasted_iota(jnp.int32, loss.shape, 0)
        loss = jnp.where(row < batch_size, loss, 0.0)
    if mask_cols:
        col = j * tile_n + lax.broadcasted_iota(jnp.int32, loss.shape, 1)
        loss = jnp.where(col < batch_size, loss, 0.0)

    # Pure elementwise accumulation (VPU); single cross-lane reduce per row block.
    acc_ref[...] += loss

    @pl.when(j == pl.num_programs(1) - 1)
    def _():
        inv_bsq = 1.0 / float(batch_size * batch_size)
        out_ref[...] = (jnp.sum(acc_ref[...]) * inv_bsq).reshape(1, 1, 1)


def contrastive_loss(fc_feats_0, fc_feats_1, textual_features, labels,
                     *, margin=0.5, tile_m=None, tile_n=None):
    """Pallas implementation of ContrastiveLoss.forward.

    fc_feats_0, fc_feats_1, textual_features: (B, D); labels: (B, B).
    """
    B, D = fc_feats_0.shape
    assert fc_feats_1.shape == (B, D)
    assert textual_features.shape == (B, D)
    assert labels.shape == (B, B)

    # Row (fc) tiling: multiple of 8 sublanes; whole problem in one block when small.
    if tile_m is None:
        tile_m = min(_round_up(B, 8), 256)
    tile_m = min(max(8, _round_up(tile_m, 8)), _round_up(B, 8))
    Bp_m = _round_up(B, tile_m)
    n_i = Bp_m // tile_m

    # Column (textual) tiling: whole extent when small, otherwise multiples of 128
    # so the labels tile stays lane-aligned and VMEM stays bounded for any B.
    if tile_n is None:
        tile_n = B if B <= 512 else 512
    if tile_n >= B:
        tile_n, Bp_n = B, B
    else:
        tile_n = max(128, (tile_n // 128) * 128)
        Bp_n = _round_up(B, tile_n)
    n_j = Bp_n // tile_n

    pad_m = Bp_m - B
    pad_n = Bp_n - B

    fc0, fc1 = fc_feats_0, fc_feats_1
    if pad_m:
        fc0 = jnp.pad(fc0, ((0, pad_m), (0, 0)))
        fc1 = jnp.pad(fc1, ((0, pad_m), (0, 0)))
    # Block-interleave fc0/fc1 so each grid step reads a single (2*tile_m, D) slab
    # and one fused matmul covers both cosine matrices.
    fc = jnp.concatenate(
        [fc0.reshape(n_i, tile_m, D), fc1.reshape(n_i, tile_m, D)], axis=1
    ).reshape(n_i * 2 * tile_m, D)

    txt = textual_features
    lab = labels
    if pad_n:
        txt = jnp.pad(txt, ((0, pad_n), (0, 0)))
    if pad_m or pad_n:
        lab = jnp.pad(lab, ((0, pad_m), (0, pad_n)))

    kernel = functools.partial(
        _contrastive_kernel,
        margin=float(margin), batch_size=B,
        tile_m=tile_m, tile_n=tile_n,
        mask_rows=bool(pad_m), mask_cols=bool(pad_n))

    itemsize = jnp.dtype(fc_feats_0.dtype).itemsize
    f32 = 4
    # Per-step VMEM footprint (double-buffered input tiles + scratch + f32 temps).
    needed = (2 * ((2 * tile_m) * D + tile_n * D + tile_m * tile_n) * itemsize
              + tile_m * tile_n * f32
              + (2 * tile_m * D + 2 * tile_n * D + 8 * tile_m * tile_n) * f32)
    try:
        vmem_cap = int(pltpu.get_tpu_info().vmem_capacity_bytes)
    except Exception:
        vmem_cap = 64 * 1024 * 1024  # conservative (v7x physical)
    vmem_limit = int(min(0.8 * vmem_cap, max(int(1.5 * needed), 32 * 1024 * 1024)))

    cost = pl.CostEstimate(
        flops=4 * B * B * D + 8 * B * D,
        transcendentals=2 * B + n_i * B,
        bytes_accessed=(2 * B * D + n_i * B * D + B * B) * itemsize + 4 * n_i,
    )

    out = pl.pallas_call(
        kernel,
        out_shape=jax.ShapeDtypeStruct((n_i, 1, 1), jnp.float32),
        grid_spec=pltpu.PrefetchScalarGridSpec(
            num_scalar_prefetch=0,
            grid=(n_i, n_j),
            in_specs=[
                pl.BlockSpec((2 * tile_m, D), lambda i, j: (i, 0)),   # fused fc0/fc1 rows
                pl.BlockSpec((tile_n, D), lambda i, j: (j, 0)),       # textual block
                pl.BlockSpec((tile_m, tile_n), lambda i, j: (i, j)),  # labels tile
            ],
            out_specs=pl.BlockSpec((1, 1, 1), lambda i, j: (i, 0, 0)),
            scratch_shapes=[pltpu.VMEM((tile_m, tile_n), jnp.float32)],
        ),
        compiler_params=pltpu.CompilerParams(
            dimension_semantics=("parallel", "arbitrary"),
            vmem_limit_bytes=vmem_limit),
        cost_estimate=cost,
    )(fc, txt, lab)
    return jnp.sum(out)


def _reference(fc0, fc1, txt, labels, margin=0.5):
    eps = 1e-8

    def cos_mat(a, b):
        an = jnp.maximum(jnp.sqrt(jnp.sum(a * a, axis=-1, keepdims=True)), eps)
        bn = jnp.maximum(jnp.sqrt(jnp.sum(b * b, axis=-1, keepdims=True)), eps)
        return (a / an) @ (b / bn).T

    def pair(cos):
        return labels * (1.0 - cos) + (1.0 - labels) * jnp.maximum(cos - margin, 0.0)

    B = fc0.shape[0]
    total = jnp.sum(pair(cos_mat(fc0, txt)) + pair(cos_mat(fc1, txt)))
    return total / (B * B)


if __name__ == "__main__":
    key = jax.random.PRNGKey(0)
    B, D = 8, 128  # batch=8, feature dim=128
    margin = 0.5

    k1, k2, k3 = jax.random.split(key, 3)
    fc_feats_0 = jax.random.normal(k1, (B, D), dtype=jnp.float32)
    fc_feats_1 = jax.random.normal(k2, (B, D), dtype=jnp.float32)
    textual_features = jax.random.normal(k3, (B, D), dtype=jnp.float32)
    labels = jnp.eye(B, dtype=jnp.float32)  # create_contrastive_labels equivalent

    result = contrastive_loss(fc_feats_0, fc_feats_1, textual_features, labels,
                              margin=margin)
    result = jax.block_until_ready(result)

    ref = _reference(fc_feats_0, fc_feats_1, textual_features, labels, margin=margin)
    assert jnp.allclose(result, ref, rtol=1e-4, atol=1e-5), (result, ref)
    print("KERNEL_OK")
</pallas_src>

<mosaic_0001>
module attributes {stable_mosaic.version = 11 : i64} {
  func.func @_contrastive_kernel(%arg0: i32, %arg1: i32, %arg2: memref<16x128xf32, #tpu.memory_space<vmem>>, %arg3: memref<8x128xf32, #tpu.memory_space<vmem>>, %arg4: memref<8x8xf32, #tpu.memory_space<vmem>>, %arg5: memref<1x1x1xf32, #tpu.memory_space<vmem>>, %arg6: memref<8x8xf32, #tpu.memory_space<vmem>>) attributes {dimension_semantics = [#tpu.dimension_semantics<parallel>, #tpu.dimension_semantics<arbitrary>], iteration_bounds = array<i64: 1, 1>, scalar_prefetch = 0 : i64, scratch_operands = 1 : i64, tpu.core_type = #tpu.core_type<tc>, window_params = [{transform_indices = @transform_0, window_bounds = array<i64: 16, 128>}, {transform_indices = @transform_1, window_bounds = array<i64: 8, 128>}, {transform_indices = @transform_2, window_bounds = array<i64: 8, 8>}, {transform_indices = @transform_3, window_bounds = array<i64: 1, 1, 1>}]} {
    %c0_i32 = arith.constant 0 : i32
    %0 = arith.cmpi eq, %arg1, %c0_i32 : i32
    %1 = arith.extui %0 : i1 to i32
    %c0_i32_0 = arith.constant 0 : i32
    %2 = arith.cmpi ne, %1, %c0_i32_0 : i32
    scf.if %2 {
      %cst_24 = arith.constant 0.000000e+00 : f32
      %54 = vector.broadcast %cst_24 : f32 to vector<8x8xf32>
      %c0_25 = arith.constant 0 : index
      %c0_26 = arith.constant 0 : index
      %55 = vector.load %arg6[%c0_25, %c0_26] : memref<8x8xf32, #tpu.memory_space<vmem>>, vector<8x8xf32>
      tpu.vector_store %arg6[%c0_25, %c0_26], %54 {strides = array<i32>} : memref<8x8xf32, #tpu.memory_space<vmem>>, vector<8x8xf32>,
    } else {
    }
    %c0 = arith.constant 0 : index
    %c0_1 = arith.constant 0 : index
    %3 = vector.load %arg2[%c0, %c0_1] : memref<16x128xf32, #tpu.memory_space<vmem>>, vector<16x128xf32>
    %c0_2 = arith.constant 0 : index
    %c0_3 = arith.constant 0 : index
    %4 = vector.load %arg3[%c0_2, %c0_3] : memref<8x128xf32, #tpu.memory_space<vmem>>, vector<8x128xf32>
    %c0_4 = arith.constant 0 : index
    %c0_5 = arith.constant 0 : index
    %5 = vector.load %arg4[%c0_4, %c0_5] : memref<8x8xf32, #tpu.memory_space<vmem>>, vector<8x8xf32>
    %6 = arith.mulf %4, %4 : vector<8x128xf32>
    %cst = arith.constant dense<0.000000e+00> : vector<8xf32>
    %7 = vector.multi_reduction <add>, %6, %cst [1] : vector<8x128xf32> to vector<8xf32>
    %8 = vector.shape_cast %7 : vector<8xf32> to vector<8x1xf32>
    %cst_6 = arith.constant 1.000000e-16 : f32
    %9 = vector.broadcast %cst_6 : f32 to vector<8x1xf32>
    %10 = arith.maximumf %8, %9 : vector<8x1xf32>
    %11 = math.rsqrt %10 : vector<8x1xf32>
    %12 = vector.broadcast %11 : vector<8x1xf32> to vector<8x128xf32>
    %13 = arith.mulf %4, %12 : vector<8x128xf32>
    %cst_7 = arith.constant dense<0.000000e+00> : vector<16x8xf32>
    %14 = tpu.matmul %3, %13, %cst_7 {dimension_numbers = #tpu.dot_dimension_numbers<[1], [1], [0], [0], [0, 0, 1, 0], [], []>} : vector<16x128xf32>, vector<8x128xf32>, vector<16x8xf32> -> vector<16x8xf32>
    %15 = arith.mulf %3, %3 : vector<16x128xf32>
    %cst_8 = arith.constant dense<0.000000e+00> : vector<16xf32>
    %16 = vector.multi_reduction <add>, %15, %cst_8 [1] : vector<16x128xf32> to vector<16xf32>
    %17 = vector.shape_cast %16 : vector<16xf32> to vector<16x1xf32>
    %cst_9 = arith.constant 1.000000e-16 : f32
    %18 = vector.broadcast %cst_9 : f32 to vector<16x1xf32>
    %19 = arith.maximumf %17, %18 : vector<16x1xf32>
    %20 = math.rsqrt %19 : vector<16x1xf32>
    %21 = vector.broadcast %20 : vector<16x1xf32> to vector<16x8xf32>
    %22 = arith.mulf %14, %21 : vector<16x8xf32>
    %23 = vector.extract_strided_slice %22 {offsets = [0, 0], sizes = [8, 8], strides = [1, 1]} : vector<16x8xf32> to vector<8x8xf32>
    %24 = vector.extract_strided_slice %22 {offsets = [8, 0], sizes = [8, 8], strides = [1, 1]} : vector<16x8xf32> to vector<8x8xf32>
    %cst_10 = arith.constant 1.000000e+00 : f32
    %25 = vector.broadcast %cst_10 : f32 to vector<8x8xf32>
    %26 = arith.subf %25, %23 : vector<8x8xf32>
    %27 = arith.mulf %5, %26 : vector<8x8xf32>
    %cst_11 = arith.constant 1.000000e+00 : f32
    %28 = vector.broadcast %cst_11 : f32 to vector<8x8xf32>
    %29 = arith.subf %28, %5 : vector<8x8xf32>
    %cst_12 = arith.constant 5.000000e-01 : f32
    %30 = vector.broadcast %cst_12 : f32 to vector<8x8xf32>
    %31 = arith.subf %23, %30 : vector<8x8xf32>
    %cst_13 = arith.constant 0.000000e+00 : f32
    %32 = vector.broadcast %cst_13 : f32 to vector<8x8xf32>
    %33 = arith.maximumf %31, %32 : vector<8x8xf32>
    %34 = arith.mulf %29, %33 : vector<8x8xf32>
    %35 = arith.addf %27, %34 : vector<8x8xf32>
    %cst_14 = arith.constant 1.000000e+00 : f32
    %36 = vector.broadcast %cst_14 : f32 to vector<8x8xf32>
    %37 = arith.subf %36, %24 : vector<8x8xf32>
    %38 = arith.mulf %5, %37 : vector<8x8xf32>
    %cst_15 = arith.constant 1.000000e+00 : f32
    %39 = vector.broadcast %cst_15 : f32 to vector<8x8xf32>
    %40 = arith.subf %39, %5 : vector<8x8xf32>
    %cst_16 = arith.constant 5.000000e-01 : f32
    %41 = vector.broadcast %cst_16 : f32 to vector<8x8xf32>
    %42 = arith.subf %24, %41 : vector<8x8xf32>
    %cst_17 = arith.constant 0.000000e+00 : f32
    %43 = vector.broadcast %cst_17 : f32 to vector<8x8xf32>
    %44 = arith.maximumf %42, %43 : vector<8x8xf32>
    %45 = arith.mulf %40, %44 : vector<8x8xf32>
    %46 = arith.addf %38, %45 : vector<8x8xf32>
    %47 = arith.addf %35, %46 : vector<8x8xf32>
    %c0_18 = arith.constant 0 : index
    %c0_19 = arith.constant 0 : index
    %48 = vector.load %arg6[%c0_18, %c0_19] : memref<8x8xf32, #tpu.memory_space<vmem>>, vector<8x8xf32>
    %49 = arith.addf %48, %47 : vector<8x8xf32>
    %c0_20 = arith.constant 0 : index
    %c0_21 = arith.constant 0 : index
    %50 = vector.load %arg6[%c0_20, %c0_21] : memref<8x8xf32, #tpu.memory_space<vmem>>, vector<8x8xf32>
    tpu.vector_store %arg6[%c0_20, %c0_21], %49 {strides = array<i32>} : memref<8x8xf32, #tpu.memory_space<vmem>>, vector<8x8xf32>,
    %c0_i32_22 = arith.constant 0 : i32
    %51 = arith.cmpi eq, %arg1, %c0_i32_22 : i32
    %52 = arith.extui %51 : i1 to i32
    %c0_i32_23 = arith.constant 0 : i32
    %53 = arith.cmpi ne, %52, %c0_i32_23 : i32
    scf.if %53 {
      %c0_24 = arith.constant 0 : index
      %c0_25 = arith.constant 0 : index
      %54 = vector.load %arg6[%c0_24, %c0_25] : memref<8x8xf32, #tpu.memory_space<vmem>>, vector<8x8xf32>
      %55 = vector.shape_cast %54 : vector<8x8xf32> to vector<1x8x8xf32>
      %cst_26 = arith.constant dense<0.000000e+00> : vector<1xf32>
      %56 = vector.multi_reduction <add>, %55, %cst_26 [1, 2] : vector<1x8x8xf32> to vector<1xf32>
      %57 = vector.shape_cast %56 : vector<1xf32> to vector<1x1x1xf32>
      %58 = vector.extract %57[0, 0, 0] : f32 from vector<1x1x1xf32>
      %cst_27 = arith.constant 1.562500e-02 : f32
      %59 = arith.mulf %58, %cst_27 : f32
      %60 = vector.broadcast %59 : f32 to vector<1x1x1xf32>
      %c0_28 = arith.constant 0 : index
      %c0_29 = arith.constant 0 : index
      %c0_30 = arith.constant 0 : index
      %61 = vector.load %arg5[%c0_28, %c0_29, %c0_30] : memref<1x1x1xf32, #tpu.memory_space<vmem>>, vector<1x1x1xf32>
      tpu.vector_store %arg5[%c0_28, %c0_29, %c0_30], %60 {strides = array<i32>} : memref<1x1x1xf32, #tpu.memory_space<vmem>>, vector<1x1x1xf32>,
    } else {
    }
    return
  }
  func.func @transform_0(%arg0: i32, %arg1: i32) -> (i32, i32) {
    %c0_i32 = arith.constant 0 : i32
    %c0_i32_0 = arith.constant 0 : i32
    return %arg0, %c0_i32 : i32, i32
  }
  func.func @transform_1(%arg0: i32, %arg1: i32) -> (i32, i32) {
    %c0_i32 = arith.constant 0 : i32
    %c0_i32_0 = arith.constant 0 : i32
    return %arg1, %c0_i32 : i32, i32
  }
  func.func @transform_2(%arg0: i32, %arg1: i32) -> (i32, i32) {
    %c0_i32 = arith.constant 0 : i32
    return %arg0, %arg1 : i32, i32
  }
  func.func @transform_3(%arg0: i32, %arg1: i32) -> (i32, i32, i32) {
    %c0_i32 = arith.constant 0 : i32
    %c0_i32_0 = arith.constant 0 : i32
    %c0_i32_1 = arith.constant 0 : i32
    return %arg0, %c0_i32, %c0_i32_0 : i32, i32, i32
  }
}

</mosaic_0001>

<llo_original>
// kernel: tpu_custom_call.1
$region0: #{tpu_custom_call.1}
  #allocation0 [shape = 'u32[]', space=smem, size = 0x4, offset = 0x4, fixed_abs, tag = 'smem constant byte address 0x4 - core index']
  #allocation1 [shape = 'u32[144,128]{1,0:T(1,128)}', space=vmem, size = 0x12000, scoped, tag = 'internal scratch']
  #allocation2 [shape = 'f32[8,8]{1,0:T(8,128)}', space=vmem, size = 0x1000, scoped, tag = 'scratch operand']
  %s0 = inlined_call_operand.hbm [shape: f32[16,128], index: 0, kind: input, shape index: {}]
  %s1 = inlined_call_operand.hbm [shape: f32[8,128], index: 1, kind: input, shape index: {}]
  %s2 = inlined_call_operand.hbm [shape: f32[8,8], index: 2, kind: input, shape index: {}]
  %s3 = inlined_call_operand.hbm [shape: f32[1,1,1], index: 3, kind: output, shape index: {}]
  %s4 = sld [smem:[#allocation0]]
  $region42: #{tpu_custom_call.1} parent=0
    _
  %s6 = ssub.s32 1, %s4
  %s7 = scalar_select 0, %s6, %s4
  $region1: #{tpu_custom_call.1} parent=0
    #allocation3 [shape = 'u8[8192]{0}', space=vmem, size = 0x2000, scoped, tag = 'input window, operand 0, single buffered']
    #allocation4 [shape = 's32[1]{0}', space=sflag, size = 0x4, scoped, tag = 'scoped memory for tpu_custom_call.1']
    #allocation5 [shape = 's32[1]{0}', space=sflag, size = 0x4, scoped, tag = 'scoped memory for tpu_custom_call.1']
    #allocation6 [shape = 'u8[4096]{0}', space=vmem, size = 0x1000, scoped, tag = 'input window, operand 1, single buffered']
    #allocation7 [shape = 's32[1]{0}', space=sflag, size = 0x4, scoped, tag = 'scoped memory for tpu_custom_call.1']
    #allocation8 [shape = 'u8[4096]{0}', space=vmem, size = 0x1000, scoped, tag = 'input window, operand 2, single buffered']
    #allocation9 [shape = 'u8[512]{0}', space=vmem, size = 0x400, scoped, tag = 'output window, operand 0, single buffered']
    %8 = vsyncpa [#allocation4], 0
    %9 = vsyncpa [#allocation7], 0
    %10 = vsyncpa [#allocation5], 0
    // Predicated region
    $region2: #{tpu_custom_call.1} parent=1 // pred_check
      _
    $region3: #{tpu_custom_call.1} parent=1 // pred_check_branch
      %12 = sbr.rel (0) target = $region5
    $region4: #{tpu_custom_call.1} parent=1 // pred_region
      %s14 = ssub.s32 256, 256
      %15 = vsyncadd [#allocation4], %s14
      %s16 = sshll.u32 [#allocation3], 4
      %s17 = int_to_ptr.vmem [resolvable:$true] %s16
      %22 = dma.hbm_to_vmem [thread:$0]  %s0, 256, %s17, [#allocation4], 128, 128, 8
    $region5: #{tpu_custom_call.1} parent=1 // pred_fallthru
      _
    // Predicated region
    $region6: #{tpu_custom_call.1} parent=1 // pred_check
      _
    $region7: #{tpu_custom_call.1} parent=1 // pred_check_branch
      %24 = sbr.rel (0) target = $region9
    $region8: #{tpu_custom_call.1} parent=1 // pred_region
      %s26 = ssub.s32 128, 128
      %27 = vsyncadd [#allocation7], %s26
      %s29 = sshll.u32 [#allocation6], 4
      %s30 = int_to_ptr.vmem [resolvable:$true] %s29
      %32 = dma.hbm_to_vmem [thread:$0]  %s1, 128, %s30, [#allocation7]
    $region9: #{tpu_custom_call.1} parent=1 // pred_fallthru
      _
    // Predicated region
    $region10: #{tpu_custom_call.1} parent=1 // pred_check
      _
    $region11: #{tpu_custom_call.1} parent=1 // pred_check_branch
      %34 = sbr.rel (0) target = $region13
    $region12: #{tpu_custom_call.1} parent=1 // pred_region
      %s36 = ssub.s32 128, 128
      %37 = vsyncadd [#allocation7], %s36
      %s39 = sshll.u32 [#allocation8], 4
      %s40 = int_to_ptr.vmem [resolvable:$true] %s39
      %42 = dma.hbm_to_vmem [thread:$0]  %s2, 128, %s40, [#allocation7]
    $region13: #{tpu_custom_call.1} parent=1 // pred_fallthru
      _
    // Predicated region
    $region14: #{tpu_custom_call.1} parent=1 // pred_check
      _
    $region15: #{tpu_custom_call.1} parent=1 // pred_check_branch
      %44 = sbr.rel (0) target = $region17
    $region16: #{tpu_custom_call.1} parent=1 // pred_region
      %45 = dma.done [#allocation4], 256
    $region17: #{tpu_custom_call.1} parent=1 // pred_fallthru
      _
    // Predicated region
    $region18: #{tpu_custom_call.1} parent=1 // pred_check
      _
    $region19: #{tpu_custom_call.1} parent=1 // pred_check_branch
      %47 = sbr.rel (0) target = $region21
    $region20: #{tpu_custom_call.1} parent=1 // pred_region
      %48 = dma.done [#allocation7], 128
    $region21: #{tpu_custom_call.1} parent=1 // pred_fallthru
      _
    // Predicated region
    $region22: #{tpu_custom_call.1} parent=1 // pred_check
      _
    $region23: #{tpu_custom_call.1} parent=1 // pred_check_branch
      %50 = sbr.rel (0) target = $region25
    $region24: #{tpu_custom_call.1} parent=1 // pred_region
      %51 = dma.done [#allocation7], 128
    $region25: #{tpu_custom_call.1} parent=1 // pred_fallthru
      _
    %p52 = scmp.eq.s32.totalorder 0, 0
    // Predicated region
    $region26: #{tpu_custom_call.1} parent=1 // pred_check
      %p53 = pneg %p52
    $region27: #{tpu_custom_call.1} parent=1 // pred_check_branch
      %55 = sbr.rel (%p53) target = $region29
    $region28: #{tpu_custom_call.1} parent=1 // pred_region
      %vm56 = vcmask 64512
      %57 = vst.msk [vmem:[#allocation2] sm:$0xff] %vm56, 0.0
    $region29: #{tpu_custom_call.1} parent=1 // pred_fallthru
      _
    %v58 = vld [vmem:[#allocation3] sm:$0xff]
    %v59 = vld [vmem:[#allocation3 + $0x8] sm:$0xff]
    %v60 = vld [vmem:[#allocation6] sm:$0xff]
    %v61 = vld [vmem:[#allocation8] sm:$0xff]
    %v62 = vmul.f32 %v60, %v60
    %63 = vadd.xlane.f32.xlu0 %v62
    %v64 = vpop.xlane.xlu0 %63
    %v65 = vmax.f32 %v64, 1e-16
    %v66 = vrsqrt.pop %v65
    %v67 = vmul.f32 %v60, %v66
    %68 = vmatprep.subr.mxu0 0.0
    %69 = vmatpush1.xpose.msra.mxu0 %v67
    %70 = vmatprep.subr.mxu0 0.0
    %71 = vmatpush1.xpose.msra.mxu0 0.0
    %72 = vmatprep.subr.mxu0 0.0
    %73 = vmatpush1.xpose.msra.mxu0 0.0
    %74 = vmatprep.subr.mxu0 0.0
    %75 = vmatpush1.xpose.msra.mxu0 0.0
    %76 = vmatprep.subr.mxu0 0.0
    %77 = vmatpush1.xpose.msra.mxu0 0.0
    %78 = vmatprep.subr.mxu0 0.0
    %79 = vmatpush1.xpose.msra.mxu0 0.0
    %80 = vmatprep.subr.mxu0 0.0
    %81 = vmatpush1.xpose.msra.mxu0 0.0
    %82 = vmatprep.subr.mxu0 0.0
    %83 = vmatpush1.xpose.msra.mxu0 0.0
    %84 = vmatprep.subr.mxu0 0.0
    %85 = vmatpush1.xpose.msra.mxu0 0.0
    %86 = vmatprep.subr.mxu0 0.0
    %87 = vmatpush1.xpose.msra.mxu0 0.0
    %88 = vmatprep.subr.mxu0 0.0
    %89 = vmatpush1.xpose.msra.mxu0 0.0
    %90 = vmatprep.subr.mxu0 0.0
    %91 = vmatpush1.xpose.msra.mxu0 0.0
    %92 = vmatprep.subr.mxu0 0.0
    %93 = vmatpush1.xpose.msra.mxu0 0.0
    %94 = vmatprep.subr.mxu0 0.0
    %95 = vmatpush1.xpose.msra.mxu0 0.0
    %96 = vmatprep.subr.mxu0 0.0
    %97 = vmatpush1.xpose.msra.mxu0 0.0
    %98 = vmatprep.subr.mxu0 0.0
    %99 = vmatpush1.xpose.msra.mxu0 0.0
    %100 = vmatprep.subr.mxu0 0.0
    %101 = vmatpush1.xpose.msra.mxu0 0.0
    %102 = vmatprep.subr.mxu0 0.0
    %103 = vmatpush1.xpose.msra.mxu0 0.0
    %104 = vmatprep.subr.mxu0 0.0
    %105 = vmatpush1.xpose.msra.mxu0 0.0
    %106 = vmatprep.subr.mxu0 0.0
    %107 = vmatpush1.xpose.msra.mxu0 0.0
    %108 = vmatprep.subr.mxu0 0.0
    %109 = vmatpush1.xpose.msra.mxu0 0.0
    %110 = vmatprep.subr.mxu0 0.0
    %111 = vmatpush1.xpose.msra.mxu0 0.0
    %112 = vmatprep.subr.mxu0 0.0
    %113 = vmatpush1.xpose.msra.mxu0 0.0
    %114 = vmatprep.subr.mxu0 0.0
    %115 = vmatpush1.xpose.msra.mxu0 0.0
    %116 = vmatprep.subr.mxu0 0.0
    %117 = vmatpush1.xpose.msra.mxu0 0.0
    %118 = vmatprep.subr.mxu0 0.0
    %119 = vmatpush1.xpose.msra.mxu0 0.0
    %120 = vmatprep.subr.mxu0 0.0
    %121 = vmatpush1.xpose.msra.mxu0 0.0
    %122 = vmatprep.subr.mxu0 0.0
    %123 = vmatpush1.xpose.msra.mxu0 0.0
    %124 = vmatprep.subr.mxu0 0.0
    %125 = vmatpush1.xpose.msra.mxu0 0.0
    %126 = vmatprep.subr.mxu0 0.0
    %127 = vmatpush1.xpose.msra.mxu0 0.0
    %128 = vmatprep.subr.mxu0 0.0
    %129 = vmatpush1.xpose.msra.mxu0 0.0
    %130 = vmatprep.subr.mxu0 0.0
    %131 = vmatpush1.xpose.msra.mxu0 0.0
    %132 = vmatprep.mubr.f32.mxu0 0.0
    %133 = vmatmul.mubr.f32.gmra.mrb[0].mxu0 %v58
    %v134 = vpop.f32.mrb[0].mxu0
    %v135 = vadd.f32 0.0, %v134
    %v136 = vpop.f32.mrb[0].mxu0
    %137 = vmatprep.mubr.f32.mxu0 0.0
    %138 = vmatmul.mubr.f32.gmra.mrb[0].mxu0 %v59
    %v139 = vpop.f32.mrb[0].mxu0
    %v140 = vadd.f32 0.0, %v139
    %v141 = vpop.f32.mrb[0].mxu0
    %142 = vdwg.mxu0
    %v143 = vmul.f32 %v58, %v58
    %v144 = vmul.f32 %v59, %v59
    %145 = vadd.xlane.f32.xlu0 %v143
    %v146 = vpop.xlane.xlu0 %145
    %147 = vadd.xlane.f32.xlu0 %v144
    %v148 = vpop.xlane.xlu0 %147
    %v149 = vmax.f32 %v146, 1e-16
    %v150 = vmax.f32 %v148, 1e-16
    %v151 = vrsqrt.pop %v149
    %v152 = vrsqrt.pop %v150
    %v153 = vmul.f32 %v135, %v151
    %v154 = vmul.f32 %v140, %v152
    %v155 = vsub.f32 1.0, %v153
    %v156 = vmul.f32 %v61, %v155
    %v157 = vsub.f32 1.0, %v61
    %v158 = vsub.f32 %v153, 0.5
    %v159 = vmax.f32 %v158, 0.0
    %v160 = vmul.f32 %v157, %v159
    %v161 = vadd.f32 %v156, %v160
    %v162 = vsub.f32 1.0, %v154
    %v163 = vmul.f32 %v61, %v162
    %v164 = vsub.f32 %v154, 0.5
    %v165 = vmax.f32 %v164, 0.0
    %v166 = vmul.f32 %v157, %v165
    %v167 = vadd.f32 %v163, %v166
    %v168 = vadd.f32 %v161, %v167
    %v169 = vld [vmem:[#allocation2] sm:$0xff]
    %v170 = vadd.f32 %v169, %v168
    %vm171 = vcmask 64512
    %172 = vst.msk [vmem:[#allocation2] sm:$0xff] %vm171, %v170
    // Predicated region
    $region30: #{tpu_custom_call.1} parent=1 // pred_check
      %p173 = pneg %p52
    $region31: #{tpu_custom_call.1} parent=1 // pred_check_branch
      %175 = sbr.rel (%p173) target = $region33
    $region32: #{tpu_custom_call.1} parent=1 // pred_region
      %v176 = vld [vmem:[#allocation2] sm:$0xff]
      %v177 = vsel %vm171, %v176, 0.0
      %178 = vadd.xlane.f32.xlu0 %v177
      %v179 = vpop.xlane.xlu0 %178
      %v180 = vrot.slane %v179, 4
      %v181 = vadd.f32 %v179, %v180
      %v182 = vrot.slane %v181, 2
      %v183 = vadd.f32 %v181, %v182
      %v184 = vrot.slane %v183, 1
      %v185 = vadd.f32 %v183, %v184
      %s186 = vtos %v185
      %s187 = smul.f32 %s186, 0.015625
      %v188 = vstv %s187
      %vm189 = vcmask 0
      %190 = vst.msk [vmem:[#allocation9] sm:$0x1] %vm189, %v188
    $region33: #{tpu_custom_call.1} parent=1 // pred_fallthru
      _
    // Predicated region
    $region34: #{tpu_custom_call.1} parent=1 // pred_check
      _
    $region35: #{tpu_custom_call.1} parent=1 // pred_check_branch
      %192 = sbr.rel (0) target = $region37
    $region36: #{tpu_custom_call.1} parent=1 // pred_region
      %s194 = ssub.s32 16, 16
      %195 = vsyncadd [#allocation5], %s194
      %s197 = sshll.u32 [#allocation9], 4
      %s198 = int_to_ptr.vmem [resolvable:$true] %s197
      %200 = dma.vmem_to_hbm [thread:$0]  %s198, 16, %s3, [#allocation5]
    $region37: #{tpu_custom_call.1} parent=1 // pred_fallthru
      _
    // Predicated region
    $region38: #{tpu_custom_call.1} parent=1 // pred_check
      _
    $region39: #{tpu_custom_call.1} parent=1 // pred_check_branch
      %202 = sbr.rel (0) target = $region41
    $region40: #{tpu_custom_call.1} parent=1 // pred_region
      %203 = dma.done [#allocation5], 16
    $region41: #{tpu_custom_call.1} parent=1 // pred_fallthru
      _
    %204 = vsyncpa [#allocation4], 1
    %205 = vsyncpa [#allocation7], 1
    %206 = vsyncpa [#allocation5], 1

</llo_original>
